<compile_context>
chip_gen: v6e
topology: v6e:2x2x1
jax: 0.10.0
libtpu: 0.0.40
codegen_flags: <defaults>
</compile_context>

<pallas_src>
import math

import jax
import jax.numpy as jnp
from jax.experimental import pallas as pl
from jax.experimental.pallas import tpu as pltpu

_GELU_C = math.sqrt(2.0 / math.pi)


def _mlp_kernel(x_ref, w1_ref, b1_ref, w2_ref, b2_ref, o_ref, acc_ref):
    h_idx = pl.program_id(1)

    @pl.when(h_idx == 0)
    def _init():
        acc_ref[...] = jnp.zeros_like(acc_ref)

    # fc1 for this hidden tile: (TM, dim) @ (dim, TH) -> (TM, TH), bf16 on the
    # MXU, f32 result (the full `dim` contraction is inside the block, so this
    # tile of the fc1 output is exact).
    x = x_ref[...].astype(jnp.bfloat16)
    h = jnp.dot(x, w1_ref[...], preferred_element_type=jnp.float32)
    h = h + b1_ref[...]                                           # (TM, TH), f32

    # new_gelu in f32: explicit multiplies (pure VPU) + one tanh (EUP slot).
    h3 = h * h * h
    g = 0.5 * h * (1.0 + jnp.tanh(_GELU_C * (h + 0.044715 * h3)))

    # fc2 partial: (TM, TH) @ (TH, dim), accumulated in the f32 scratch.
    acc_ref[...] += jnp.dot(g.astype(jnp.bfloat16), w2_ref[...],
                            preferred_element_type=jnp.float32)

    @pl.when(h_idx == pl.num_programs(1) - 1)
    def _finalize():
        o_ref[...] = (acc_ref[...] + b2_ref[...]).astype(o_ref.dtype)


def _pick_tile(n: int, candidates: tuple) -> int:
    for c in candidates:
        if c <= n and n % c == 0:
            return c
    return n  # small / odd shapes: use the full extent as a single block


def mlp_pallas(x, w1, b1, w2, b2, *, tm_candidates=(512, 256, 128),
               th_candidates=(1024, 512, 256, 128)):
    """x: (B, S, dim); w1: (dim, hidden); b1: (hidden,); w2: (hidden, dim); b2: (dim,)."""
    B, S, dim = x.shape
    hidden = w1.shape[1]
    M = B * S

    # Tile sizes: large, MXU-aligned, and (8,128)-legal.  On v7x (64 MiB VMEM)
    # drop th_candidates to (512, 256, 128) if VMEM pressure shows up.
    TM = _pick_tile(M, tm_candidates)
    TH = _pick_tile(hidden, th_candidates)
    grid = (M // TM, hidden // TH)

    x2d = x.reshape(M, dim)
    # bf16 weights: halves weight DMA bytes and feeds the MXU at full rate.
    w1b = w1.astype(jnp.bfloat16)
    w2b = w2.astype(jnp.bfloat16)
    # Biases stay f32 (added to the f32 fc1 result / f32 accumulator).
    b1_2d = b1.reshape(1, hidden).astype(jnp.float32)
    b2_2d = b2.reshape(1, dim).astype(jnp.float32)

    itemsize = jnp.dtype(x.dtype).itemsize
    cost = pl.CostEstimate(
        flops=4 * M * dim * hidden,           # two matmuls, 2 flops per MAC
        transcendentals=M * hidden,           # one tanh per hidden activation
        bytes_accessed=(M * dim * itemsize            # x in
                        + dim * hidden * 2            # w1 (bf16)
                        + hidden * dim * 2            # w2 (bf16)
                        + hidden * 4 + dim * 4        # biases
                        + M * dim * itemsize),        # out
    )

    out = pl.pallas_call(
        _mlp_kernel,
        out_shape=jax.ShapeDtypeStruct((M, dim), x.dtype),
        grid=grid,
        in_specs=[
            pl.BlockSpec((TM, dim), lambda m, h: (m, 0)),    # x tile
            pl.BlockSpec((dim, TH), lambda m, h: (0, h)),    # w1 tile
            pl.BlockSpec((1, TH), lambda m, h: (0, h)),      # b1 tile
            pl.BlockSpec((TH, dim), lambda m, h: (h, 0)),    # w2 tile
            pl.BlockSpec((1, dim), lambda m, h: (0, 0)),     # b2 (whole)
        ],
        out_specs=pl.BlockSpec((TM, dim), lambda m, h: (m, 0)),  # constant over h -> accumulator
        scratch_shapes=[pltpu.VMEM((TM, dim), jnp.float32)],
        compiler_params=pltpu.CompilerParams(
            dimension_semantics=("parallel", "arbitrary"),
            vmem_limit_bytes=48 * 1024 * 1024,
        ),
        cost_estimate=cost,
    )(x2d, w1b, b1_2d, w2b, b2_2d)

    return out.reshape(B, S, dim)


def mlp_ref(x, w1, b1, w2, b2):
    h = jnp.einsum("bsd,dh->bsh", x, w1) + b1
    g = 0.5 * h * (1.0 + jnp.tanh(_GELU_C * (h + 0.044715 * h ** 3)))
    return jnp.einsum("bsh,hd->bsd", g, w2) + b2


if __name__ == "__main__":
    key = jax.random.PRNGKey(0)
    B, S, dim, hidden = 2, 8, 32, 64

    k_x, k_w1, k_b1, k_w2, k_b2 = jax.random.split(key, 5)

    # Deterministic param init, PyTorch-Linear-style uniform(-1/sqrt(fan_in), 1/sqrt(fan_in)).
    bound1 = 1.0 / math.sqrt(dim)
    bound2 = 1.0 / math.sqrt(hidden)
    w1 = jax.random.uniform(k_w1, (dim, hidden), jnp.float32, -bound1, bound1)
    b1 = jax.random.uniform(k_b1, (hidden,), jnp.float32, -bound1, bound1)
    w2 = jax.random.uniform(k_w2, (hidden, dim), jnp.float32, -bound2, bound2)
    b2 = jax.random.uniform(k_b2, (dim,), jnp.float32, -bound2, bound2)

    x = jax.random.normal(k_x, (B, S, dim), jnp.float32)

    y = mlp_pallas(x, w1, b1, w2, b2)
    y = jax.block_until_ready(y)

    # f32 reference; kernel uses bf16 MXU operands with f32 accumulation, so
    # compare with a tolerance that covers bf16 mantissa error (~0.4% relative).
    y_ref = mlp_ref(x, w1, b1, w2, b2)
    assert y.shape == (B, S, dim)
    assert jnp.allclose(y, y_ref, atol=2e-2, rtol=2e-2), "mismatch vs reference"

    print("KERNEL_OK")
</pallas_src>

<mosaic_0001>
module attributes {stable_mosaic.version = 11 : i64} {
  func.func @_mlp_kernel(%arg0: i32, %arg1: i32, %arg2: memref<16x32xf32, #tpu.memory_space<vmem>>, %arg3: memref<32x64xbf16, #tpu.memory_space<vmem>>, %arg4: memref<1x64xf32, #tpu.memory_space<vmem>>, %arg5: memref<64x32xbf16, #tpu.memory_space<vmem>>, %arg6: memref<1x32xf32, #tpu.memory_space<vmem>>, %arg7: memref<16x32xf32, #tpu.memory_space<vmem>>, %arg8: memref<16x32xf32, #tpu.memory_space<vmem>>) attributes {dimension_semantics = [#tpu.dimension_semantics<parallel>, #tpu.dimension_semantics<arbitrary>], iteration_bounds = array<i64: 1, 1>, scalar_prefetch = 0 : i64, scratch_operands = 1 : i64, tpu.core_type = #tpu.core_type<tc>, window_params = [{transform_indices = @transform_0, window_bounds = array<i64: 16, 32>}, {transform_indices = @transform_1, window_bounds = array<i64: 32, 64>}, {transform_indices = @transform_2, window_bounds = array<i64: 1, 64>}, {transform_indices = @transform_3, window_bounds = array<i64: 64, 32>}, {pipeline_mode = #tpu.pipeline_mode<synchronous>, transform_indices = @transform_4, window_bounds = array<i64: 1, 32>}, {transform_indices = @transform_5, window_bounds = array<i64: 16, 32>}]} {
    %c0_i32 = arith.constant 0 : i32
    %0 = arith.cmpi eq, %arg1, %c0_i32 : i32
    %1 = arith.extui %0 : i1 to i32
    %c0_i32_0 = arith.constant 0 : i32
    %2 = arith.cmpi ne, %1, %c0_i32_0 : i32
    scf.if %2 {
      %cst_19 = arith.constant 0.000000e+00 : f32
      %32 = vector.broadcast %cst_19 : f32 to vector<16x32xf32>
      %c0_20 = arith.constant 0 : index
      %c0_21 = arith.constant 0 : index
      %33 = vector.load %arg8[%c0_20, %c0_21] : memref<16x32xf32, #tpu.memory_space<vmem>>, vector<16x32xf32>
      tpu.vector_store %arg8[%c0_20, %c0_21], %32 {strides = array<i32>} : memref<16x32xf32, #tpu.memory_space<vmem>>, vector<16x32xf32>,
    } else {
    }
    %c0 = arith.constant 0 : index
    %c0_1 = arith.constant 0 : index
    %3 = vector.load %arg2[%c0, %c0_1] : memref<16x32xf32, #tpu.memory_space<vmem>>, vector<16x32xf32>
    %4 = arith.truncf %3 : vector<16x32xf32> to vector<16x32xbf16>
    %c0_2 = arith.constant 0 : index
    %c0_3 = arith.constant 0 : index
    %5 = vector.load %arg3[%c0_2, %c0_3] : memref<32x64xbf16, #tpu.memory_space<vmem>>, vector<32x64xbf16>
    %cst = arith.constant dense<0.000000e+00> : vector<16x64xf32>
    %6 = tpu.matmul %4, %5, %cst {dimension_numbers = #tpu.dot_dimension_numbers<[1], [0], [0], [1], [0, 0, 1, 1], [], []>} : vector<16x32xbf16>, vector<32x64xbf16>, vector<16x64xf32> -> vector<16x64xf32>
    %c0_4 = arith.constant 0 : index
    %c0_5 = arith.constant 0 : index
    %7 = vector.load %arg4[%c0_4, %c0_5] : memref<1x64xf32, #tpu.memory_space<vmem>>, vector<1x64xf32>
    %8 = vector.broadcast %7 : vector<1x64xf32> to vector<16x64xf32>
    %9 = arith.addf %6, %8 : vector<16x64xf32>
    %10 = arith.mulf %9, %9 : vector<16x64xf32>
    %11 = arith.mulf %10, %9 : vector<16x64xf32>
    %cst_6 = arith.constant 5.000000e-01 : f32
    %12 = vector.broadcast %cst_6 : f32 to vector<16x64xf32>
    %13 = arith.mulf %12, %9 : vector<16x64xf32>
    %cst_7 = arith.constant 4.471500e-02 : f32
    %14 = vector.broadcast %cst_7 : f32 to vector<16x64xf32>
    %15 = arith.mulf %14, %11 : vector<16x64xf32>
    %16 = arith.addf %9, %15 : vector<16x64xf32>
    %cst_8 = arith.constant 0.797884583 : f32
    %17 = vector.broadcast %cst_8 : f32 to vector<16x64xf32>
    %18 = arith.mulf %17, %16 : vector<16x64xf32>
    %19 = math.tanh %18 : vector<16x64xf32>
    %cst_9 = arith.constant 1.000000e+00 : f32
    %20 = vector.broadcast %cst_9 : f32 to vector<16x64xf32>
    %21 = arith.addf %20, %19 : vector<16x64xf32>
    %22 = arith.mulf %13, %21 : vector<16x64xf32>
    %c0_10 = arith.constant 0 : index
    %c0_11 = arith.constant 0 : index
    %23 = vector.load %arg8[%c0_10, %c0_11] : memref<16x32xf32, #tpu.memory_space<vmem>>, vector<16x32xf32>
    %24 = arith.truncf %22 : vector<16x64xf32> to vector<16x64xbf16>
    %c0_12 = arith.constant 0 : index
    %c0_13 = arith.constant 0 : index
    %25 = vector.load %arg5[%c0_12, %c0_13] : memref<64x32xbf16, #tpu.memory_space<vmem>>, vector<64x32xbf16>
    %cst_14 = arith.constant dense<0.000000e+00> : vector<16x32xf32>
    %26 = tpu.matmul %24, %25, %cst_14 {dimension_numbers = #tpu.dot_dimension_numbers<[1], [0], [0], [1], [0, 0, 1, 1], [], []>} : vector<16x64xbf16>, vector<64x32xbf16>, vector<16x32xf32> -> vector<16x32xf32>
    %27 = arith.addf %23, %26 : vector<16x32xf32>
    %c0_15 = arith.constant 0 : index
    %c0_16 = arith.constant 0 : index
    %28 = vector.load %arg8[%c0_15, %c0_16] : memref<16x32xf32, #tpu.memory_space<vmem>>, vector<16x32xf32>
    tpu.vector_store %arg8[%c0_15, %c0_16], %27 {strides = array<i32>} : memref<16x32xf32, #tpu.memory_space<vmem>>, vector<16x32xf32>,
    %c0_i32_17 = arith.constant 0 : i32
    %29 = arith.cmpi eq, %arg1, %c0_i32_17 : i32
    %30 = arith.extui %29 : i1 to i32
    %c0_i32_18 = arith.constant 0 : i32
    %31 = arith.cmpi ne, %30, %c0_i32_18 : i32
    scf.if %31 {
      %c0_19 = arith.constant 0 : index
      %c0_20 = arith.constant 0 : index
      %32 = vector.load %arg8[%c0_19, %c0_20] : memref<16x32xf32, #tpu.memory_space<vmem>>, vector<16x32xf32>
      %c0_21 = arith.constant 0 : index
      %c0_22 = arith.constant 0 : index
      %33 = vector.load %arg6[%c0_21, %c0_22] : memref<1x32xf32, #tpu.memory_space<vmem>>, vector<1x32xf32>
      %34 = vector.broadcast %33 : vector<1x32xf32> to vector<16x32xf32>
      %35 = arith.addf %32, %34 : vector<16x32xf32>
      %c0_23 = arith.constant 0 : index
      %c0_24 = arith.constant 0 : index
      %36 = vector.load %arg7[%c0_23, %c0_24] : memref<16x32xf32, #tpu.memory_space<vmem>>, vector<16x32xf32>
      tpu.vector_store %arg7[%c0_23, %c0_24], %35 {strides = array<i32>} : memref<16x32xf32, #tpu.memory_space<vmem>>, vector<16x32xf32>,
    } else {
    }
    return
  }
  func.func @transform_0(%arg0: i32, %arg1: i32) -> (i32, i32) {
    %c0_i32 = arith.constant 0 : i32
    %c0_i32_0 = arith.constant 0 : i32
    return %arg0, %c0_i32 : i32, i32
  }
  func.func @transform_1(%arg0: i32, %arg1: i32) -> (i32, i32) {
    %c0_i32 = arith.constant 0 : i32
    %c0_i32_0 = arith.constant 0 : i32
    return %c0_i32, %arg1 : i32, i32
  }
  func.func @transform_2(%arg0: i32, %arg1: i32) -> (i32, i32) {
    %c0_i32 = arith.constant 0 : i32
    %c0_i32_0 = arith.constant 0 : i32
    return %c0_i32, %arg1 : i32, i32
  }
  func.func @transform_3(%arg0: i32, %arg1: i32) -> (i32, i32) {
    %c0_i32 = arith.constant 0 : i32
    %c0_i32_0 = arith.constant 0 : i32
    return %arg1, %c0_i32 : i32, i32
  }
  func.func @transform_4(%arg0: i32, %arg1: i32) -> (i32, i32) {
    %c0_i32 = arith.constant 0 : i32
    %c0_i32_0 = arith.constant 0 : i32
    %c0_i32_1 = arith.constant 0 : i32
    return %c0_i32, %c0_i32_0 : i32, i32
  }
  func.func @transform_5(%arg0: i32, %arg1: i32) -> (i32, i32) {
    %c0_i32 = arith.constant 0 : i32
    %c0_i32_0 = arith.constant 0 : i32
    return %arg0, %c0_i32 : i32, i32
  }
}

</mosaic_0001>

<llo_original>
// kernel: tpu_custom_call.1
$region0: #{tpu_custom_call.1}
  #allocation0 [shape = 'u32[]', space=smem, size = 0x4, offset = 0x4, fixed_abs, tag = 'smem constant byte address 0x4 - core index']
  #allocation1 [shape = 'u32[144,128]{1,0:T(1,128)}', space=vmem, size = 0x12000, scoped, tag = 'internal scratch']
  #allocation2 [shape = 'f32[16,32]{1,0:T(8,128)}', space=vmem, size = 0x2000, scoped, tag = 'scratch operand']
  %s0 = inlined_call_operand.vmem [shape: f32[16,32], index: 0, kind: input, shape index: {}]
  %s1 = inlined_call_operand.vmem [shape: bf16[32,64], index: 1, kind: input, shape index: {}]
  %s2 = inlined_call_operand.vmem [shape: f32[1,64], index: 2, kind: input, shape index: {}]
  %s3 = inlined_call_operand.vmem [shape: bf16[64,32], index: 3, kind: input, shape index: {}]
  %s4 = inlined_call_operand.vmem [shape: f32[1,32], index: 4, kind: input, shape index: {}]
  %s5 = inlined_call_operand.hbm [shape: f32[16,32], index: 5, kind: output, shape index: {}]
  %s6 = sld [smem:[#allocation0]]
  $region38: #{tpu_custom_call.1} parent=0
    _
  %s8 = ssub.s32 1, %s6
  %s9 = scalar_select 0, %s8, %s6
  $region1: #{tpu_custom_call.1} parent=0
    #allocation3 [shape = 'u8[8192]{0}', space=vmem, size = 0x2000, scoped, tag = 'output window, operand 0, single buffered']
    #allocation4 [shape = 's32[1]{0}', space=sflag, size = 0x4, scoped, tag = 'scoped memory for tpu_custom_call.1']
    %10 = vsyncpa [#allocation4], 0
    // Predicated region
    $region2: #{tpu_custom_call.1} parent=1 // pred_check
      _
    $region3: #{tpu_custom_call.1} parent=1 // pred_check_branch
      %12 = sbr.rel (0) target = $region5
    $region4: #{tpu_custom_call.1} parent=1 // pred_region
      _
    $region5: #{tpu_custom_call.1} parent=1 // pred_fallthru
      _
    // Predicated region
    $region6: #{tpu_custom_call.1} parent=1 // pred_check
      _
    $region7: #{tpu_custom_call.1} parent=1 // pred_check_branch
      %14 = sbr.rel (0) target = $region9
    $region8: #{tpu_custom_call.1} parent=1 // pred_region
      _
    $region9: #{tpu_custom_call.1} parent=1 // pred_fallthru
      _
    // Predicated region
    $region10: #{tpu_custom_call.1} parent=1 // pred_check
      _
    $region11: #{tpu_custom_call.1} parent=1 // pred_check_branch
      %16 = sbr.rel (0) target = $region13
    $region12: #{tpu_custom_call.1} parent=1 // pred_region
      _
    $region13: #{tpu_custom_call.1} parent=1 // pred_fallthru
      _
    // Predicated region
    $region14: #{tpu_custom_call.1} parent=1 // pred_check
      _
    $region15: #{tpu_custom_call.1} parent=1 // pred_check_branch
      %18 = sbr.rel (0) target = $region17
    $region16: #{tpu_custom_call.1} parent=1 // pred_region
      _
    $region17: #{tpu_custom_call.1} parent=1 // pred_fallthru
      _
    // Predicated region
    $region18: #{tpu_custom_call.1} parent=1 // pred_check
      _
    $region19: #{tpu_custom_call.1} parent=1 // pred_check_branch
      %20 = sbr.rel (0) target = $region21
    $region20: #{tpu_custom_call.1} parent=1 // pred_region
      _
    $region21: #{tpu_custom_call.1} parent=1 // pred_fallthru
      _
    %p22 = scmp.eq.s32.totalorder 0, 0
    // Predicated region
    $region22: #{tpu_custom_call.1} parent=1 // pred_check
      %p23 = pneg %p22
    $region23: #{tpu_custom_call.1} parent=1 // pred_check_branch
      %25 = sbr.rel (%p23) target = $region25
    $region24: #{tpu_custom_call.1} parent=1 // pred_region
      %vm26 = vcmask 261120
      %27 = vst.msk [vmem:[#allocation2] sm:$0xff] %vm26, 0.0
      %28 = vst.msk [vmem:[#allocation2 + $0x8] sm:$0xff] %vm26, 0.0
    $region25: #{tpu_custom_call.1} parent=1 // pred_fallthru
      _
    %v29 = vld [vmem:[%s0] sm:$0xff]
    %v30 = vld [vmem:[%s0 + $0x8] sm:$0xff]
    %v31 = vpack.c.bf16 %v30, %v29
    %v32 = vld [vmem:[%s1] sm:$0xf]
    %v33 = vld [vmem:[%s1 + $0x4] sm:$0xf]
    %v34 = vld [vmem:[%s1 + $0x8] sm:$0xf]
    %v35 = vld [vmem:[%s1 + $0xc] sm:$0xf]
    %v36 = vld [vmem:[%s2] sm:$0x1]
    %v38 = vlaneseq
    %v39 = vshrl.u32 %v38, 7
    %v40 = vsub.s32 0, %v39
    %v41 = vrot.slane %v36, %v40
    %v47 = vunpack.c.l.b16 %v32
    %v48 = vunpack.c.l.b16 %v33
    %v49 = vunpack.c.l.b16 %v34
    %v50 = vunpack.c.l.b16 %v35
    %v51 = vpack.c.b16 %v48, %v47
    %v52 = vpack.c.b16 %v50, %v49
    %vm55 = vcmask 261120
    %v57 = vsel %vm55, %v31, 0
    %59 = vmatprep.subr.bf16.mxu0 0
    %60 = vmatpush1.bf16.msra.mxu0 0
    %61 = vmatprep.subr.bf16.mxu0 0
    %62 = vmatpush1.bf16.msra.mxu0 0
    %63 = vmatprep.subr.bf16.mxu0 0
    %64 = vmatpush1.bf16.msra.mxu0 0
    %65 = vmatprep.subr.bf16.mxu0 0
    %66 = vmatpush1.bf16.msra.mxu0 0
    %67 = vmatprep.subr.bf16.mxu0 0
    %68 = vmatpush1.bf16.msra.mxu0 0
    %69 = vmatprep.subr.bf16.mxu0 0
    %70 = vmatpush1.bf16.msra.mxu0 0
    %71 = vmatprep.subr.bf16.mxu0 0
    %72 = vmatpush1.bf16.msra.mxu0 %v52
    %73 = vmatprep.subr.bf16.mxu0 0
    %74 = vmatpush1.bf16.msra.mxu0 %v51
    %75 = vmatprep.subr.bf16.mxu0 0
    %76 = vmatpush2.bf16.msra.mxu0 0
    %77 = vmatprep.subr.bf16.mxu0 0
    %78 = vmatpush2.bf16.msra.mxu0 0
    %79 = vmatprep.subr.bf16.mxu0 0
    %80 = vmatpush2.bf16.msra.mxu0 0
    %81 = vmatprep.subr.bf16.mxu0 0
    %82 = vmatpush2.bf16.msra.mxu0 0
    %83 = vmatprep.subr.bf16.mxu0 0
    %84 = vmatpush2.bf16.msra.mxu0 0
    %85 = vmatprep.subr.bf16.mxu0 0
    %86 = vmatpush2.bf16.msra.mxu0 0
    %87 = vmatprep.subr.bf16.mxu0 0
    %88 = vmatpush2.bf16.msra.mxu0 0
    %89 = vmatprep.subr.bf16.mxu0 0
    %90 = vmatpush2.bf16.msra.mxu0 0
    %91 = vmatprep.mubr.bf16.mxu0 0
    %92 = vmatmul.mubr.bf16.gmra.mxu0 %v57
    %v93 = vpop.f32.mrf.mxu0
    %v94 = vadd.f32 %v41, %v93
    %v95 = vpop.f32.mrf.mxu0
    %v96 = vpop.f32.mrf.mxu0
    %v97 = vadd.f32 %v41, %v96
    %v98 = vpop.f32.mrf.mxu0
    %99 = vdwg.mxu0
    %v100 = vmul.f32 %v94, %v94
    %v101 = vmul.f32 %v97, %v97
    %v102 = vmul.f32 %v100, %v94
    %v103 = vmul.f32 %v101, %v97
    %v104 = vmul.f32 %v94, 0.5
    %v105 = vmul.f32 %v97, 0.5
    %v106 = vmul.f32 %v102, 0.044715
    %v107 = vmul.f32 %v103, 0.044715
    %v108 = vadd.f32 %v94, %v106
    %v109 = vadd.f32 %v97, %v107
    %v110 = vmul.f32 %v108, 0.7978846
    %v111 = vmul.f32 %v109, 0.7978846
    %v112 = vtanh.pop %v110
    %v113 = vtanh.pop %v111
    %v114 = vadd.f32 %v112, 1.0
    %v115 = vadd.f32 %v113, 1.0
    %v116 = vmul.f32 %v104, %v114
    %v117 = vmul.f32 %v105, %v115
    %v118 = vld [vmem:[#allocation2] sm:$0xff]
    %v119 = vld [vmem:[#allocation2 + $0x8] sm:$0xff]
    %v120 = vpack.c.bf16 %v117, %v116
    %v121 = vld [vmem:[%s3] sm:$0xf]
    %v122 = vld [vmem:[%s3 + $0x4] sm:$0xf]
    %v123 = vld [vmem:[%s3 + $0x8] sm:$0xf]
    %v124 = vld [vmem:[%s3 + $0xc] sm:$0xf]
    %v125 = vld [vmem:[%s3 + $0x10] sm:$0xf]
    %v126 = vld [vmem:[%s3 + $0x14] sm:$0xf]
    %v127 = vld [vmem:[%s3 + $0x18] sm:$0xf]
    %v128 = vld [vmem:[%s3 + $0x1c] sm:$0xf]
    %v137 = vunpack.c.l.b16 %v121
    %v138 = vunpack.c.l.b16 %v122
    %v139 = vunpack.c.l.b16 %v123
    %v140 = vunpack.c.l.b16 %v124
    %v141 = vunpack.c.l.b16 %v125
    %v142 = vunpack.c.l.b16 %v126
    %v143 = vunpack.c.l.b16 %v127
    %v144 = vunpack.c.l.b16 %v128
    %v145 = vpack.c.b16 %v138, %v137
    %v146 = vpack.c.b16 %v140, %v139
    %v147 = vpack.c.b16 %v142, %v141
    %v148 = vpack.c.b16 %v144, %v143
    %vm153 = vcmask 523264
    %v155 = vsel %vm153, %v120, 0
    %157 = vmatprep.subr.bf16.mxu0 0
    %158 = vmatpush1.bf16.msra.mxu0 0
    %159 = vmatprep.subr.bf16.mxu0 0
    %160 = vmatpush1.bf16.msra.mxu0 0
    %161 = vmatprep.subr.bf16.mxu0 0
    %162 = vmatpush1.bf16.msra.mxu0 0
    %163 = vmatprep.subr.bf16.mxu0 0
    %164 = vmatpush1.bf16.msra.mxu0 0
    %165 = vmatprep.subr.bf16.mxu0 0
    %166 = vmatpush1.bf16.msra.mxu0 %v148
    %167 = vmatprep.subr.bf16.mxu0 0
    %168 = vmatpush1.bf16.msra.mxu0 %v147
    %169 = vmatprep.subr.bf16.mxu0 0
    %170 = vmatpush1.bf16.msra.mxu0 %v146
    %171 = vmatprep.subr.bf16.mxu0 0
    %172 = vmatpush1.bf16.msra.mxu0 %v145
    %173 = vmatprep.subr.bf16.mxu0 0
    %174 = vmatpush2.bf16.msra.mxu0 0
    %175 = vmatprep.subr.bf16.mxu0 0
    %176 = vmatpush2.bf16.msra.mxu0 0
    %177 = vmatprep.subr.bf16.mxu0 0
    %178 = vmatpush2.bf16.msra.mxu0 0
    %179 = vmatprep.subr.bf16.mxu0 0
    %180 = vmatpush2.bf16.msra.mxu0 0
    %181 = vmatprep.subr.bf16.mxu0 0
    %182 = vmatpush2.bf16.msra.mxu0 0
    %183 = vmatprep.subr.bf16.mxu0 0
    %184 = vmatpush2.bf16.msra.mxu0 0
    %185 = vmatprep.subr.bf16.mxu0 0
    %186 = vmatpush2.bf16.msra.mxu0 0
    %187 = vmatprep.subr.bf16.mxu0 0
    %188 = vmatpush2.bf16.msra.mxu0 0
    %189 = vmatprep.mubr.bf16.mxu0 0
    %190 = vmatmul.mubr.bf16.gmra.mxu0 %v155
    %v191 = vpop.f32.mrf.mxu0
    %v192 = vadd.f32 0.0, %v191
    %v193 = vpop.f32.mrf.mxu0
    %v194 = vpop.f32.mrf.mxu0
    %v195 = vadd.f32 0.0, %v194
    %v196 = vpop.f32.mrf.mxu0
    %197 = vdwg.mxu0
    %v198 = vadd.f32 %v118, %v192
    %v199 = vadd.f32 %v119, %v195
    %200 = vst.msk [vmem:[#allocation2] sm:$0xff] %vm55, %v198
    %201 = vst.msk [vmem:[#allocation2 + $0x8] sm:$0xff] %vm55, %v199
    // Predicated region
    $region26: #{tpu_custom_call.1} parent=1 // pred_check
      %p202 = pneg %p22
    $region27: #{tpu_custom_call.1} parent=1 // pred_check_branch
      %204 = sbr.rel (%p202) target = $region29
    $region28: #{tpu_custom_call.1} parent=1 // pred_region
      %v205 = vld [vmem:[#allocation2] sm:$0xff]
      %v206 = vld [vmem:[#allocation2 + $0x8] sm:$0xff]
      %v207 = vld [vmem:[%s4] sm:$0x1]
      %v209 = vlaneseq
      %v210 = vshrl.u32 %v209, 7
      %v211 = vsub.s32 0, %v210
      %v212 = vrot.slane %v207, %v211
      %v214 = vadd.f32 %v205, %v212
      %v215 = vadd.f32 %v206, %v212
      %216 = vst.msk [vmem:[#allocation3] sm:$0xff] %vm55, %v214
      %217 = vst.msk [vmem:[#allocation3 + $0x8] sm:$0xff] %vm55, %v215
    $region29: #{tpu_custom_call.1} parent=1 // pred_fallthru
      _
    // Predicated region
    $region30: #{tpu_custom_call.1} parent=1 // pred_check
      _
    $region31: #{tpu_custom_call.1} parent=1 // pred_check_branch
      %219 = sbr.rel (0) target = $region33
    $region32: #{tpu_custom_call.1} parent=1 // pred_region
      %s221 = ssub.s32 256, 256
      %222 = vsyncadd [#allocation4], %s221
      %s223 = sshll.u32 [#allocation3], 4
      %s224 = int_to_ptr.vmem [resolvable:$true] %s223
      %229 = dma.vmem_to_hbm [thread:$0]  %s224, 256, %s5, [#allocation4], 128, 128, 8
    $region33: #{tpu_custom_call.1} parent=1 // pred_fallthru
      _
    // Predicated region
    $region34: #{tpu_custom_call.1} parent=1 // pred_check
      _
    $region35: #{tpu_custom_call.1} parent=1 // pred_check_branch
      %231 = sbr.rel (0) target = $region37
    $region36: #{tpu_custom_call.1} parent=1 // pred_region
      %232 = dma.done [#allocation4], 256
    $region37: #{tpu_custom_call.1} parent=1 // pred_fallthru
      _
    %233 = vsyncpa [#allocation4], 1

</llo_original>
